<compile_context>
chip_gen: v6e
topology: v6e:2x2x1
jax: 0.10.0
libtpu: 0.0.40
codegen_flags: <defaults>
</compile_context>

<pallas_src>
import functools

import jax
import jax.numpy as jnp
from jax.experimental import pallas as pl
from jax.experimental.pallas import tpu as pltpu


def _round_up(x, m):
    return (x + m - 1) // m * m


# --------------------------------------------------------------------------
# Kernel: one fused matmul  out = x @ W_fused + b_fused
# --------------------------------------------------------------------------
def _q_fused_kernel(x_ref, w_ref, b_ref, out_ref):
    out_ref[...] = (
        jnp.dot(x_ref[...], w_ref[...], preferred_element_type=jnp.float32)
        + b_ref[...]
    )


def _q_pallas(x_mat, w_fused, b_fused, tile_m):
    m_pad, c_in = x_mat.shape
    c_out_pad = w_fused.shape[1]
    grid = (m_pad // tile_m,)

    flops = 2 * m_pad * c_in * c_out_pad
    bytes_accessed = 4 * (m_pad * c_in            # x read
                          + m_pad * c_out_pad     # out write
                          + c_in * c_out_pad      # fused weight
                          + c_out_pad)            # fused bias

    return pl.pallas_call(
        _q_fused_kernel,
        out_shape=jax.ShapeDtypeStruct((m_pad, c_out_pad), jnp.float32),
        grid_spec=pltpu.PrefetchScalarGridSpec(
            num_scalar_prefetch=0,
            grid=grid,
            in_specs=[
                pl.BlockSpec((tile_m, c_in), lambda i: (i, 0)),       # x tile
                pl.BlockSpec((c_in, c_out_pad), lambda i: (0, 0)),    # W (resident)
                pl.BlockSpec((1, c_out_pad), lambda i: (0, 0)),       # b (resident)
            ],
            out_specs=pl.BlockSpec((tile_m, c_out_pad), lambda i: (i, 0)),
        ),
        compiler_params=pltpu.CompilerParams(
            dimension_semantics=("parallel",),
            vmem_limit_bytes=32 * 1024 * 1024,
        ),
        cost_estimate=pl.CostEstimate(
            flops=flops, transcendentals=0, bytes_accessed=bytes_accessed),
    )(x_mat, w_fused, b_fused)


# --------------------------------------------------------------------------
# Parameters (matmul layout: W is (C_in, C_out), bias is (1, C_out))
# --------------------------------------------------------------------------
def make_q_params(key, discrete_vars, continuous_vars, c_in=1024, c_hidden=128):
    ks = jax.random.split(key, 8)

    def init_linear(kw, kb, cin, cout):
        scale = 1.0 / jnp.sqrt(cin)
        w = jax.random.uniform(kw, (cin, cout), jnp.float32, -scale, scale)
        b = jax.random.uniform(kb, (1, cout), jnp.float32, -scale, scale)
        return w, b

    w1, b1 = init_linear(ks[0], ks[1], c_in, c_hidden)
    wd, bd = init_linear(ks[2], ks[3], c_hidden, discrete_vars)
    wm, bm = init_linear(ks[4], ks[5], c_hidden, continuous_vars)
    wv, bv = init_linear(ks[6], ks[7], c_hidden, continuous_vars)
    return dict(w1=w1, b1=b1, wd=wd, bd=bd, wm=wm, bm=bm, wv=wv, bv=bv)


# --------------------------------------------------------------------------
# Forward wrapper
# --------------------------------------------------------------------------
@functools.partial(jax.jit, static_argnames=("discrete_vars", "continuous_vars"))
def q_forward(x_nchw, params, *, discrete_vars, continuous_vars):
    """x_nchw: (N, 1024, H, W) float32 (NCHW, like the PyTorch module)."""
    n, c_in, h, w = x_nchw.shape
    m = n * h * w
    d, c = discrete_vars, continuous_vars
    heads = d + 2 * c
    c_out_pad = _round_up(heads, 128)

    # Fold trunk conv into the three heads (forward has no nonlinearity between
    # them, so the composition is a single affine map).
    w_heads = jnp.concatenate([params["wd"], params["wm"], params["wv"]], axis=1)
    b_heads = jnp.concatenate([params["bd"], params["bm"], params["bv"]], axis=1)
    w_fused = params["w1"] @ w_heads                    # (1024, D+2C)
    b_fused = params["b1"] @ w_heads + b_heads          # (1,    D+2C)
    w_fused = jnp.pad(w_fused, ((0, 0), (0, c_out_pad - heads)))
    b_fused = jnp.pad(b_fused, ((0, 0), (0, c_out_pad - heads)))

    # Row tiling: biggest of {512, full} that keeps divisibility.
    tile_m = min(512, _round_up(max(m, 8), 8))
    m_pad = _round_up(max(m, 8), tile_m)

    # NCHW -> (M, C_in) channels-last (free reshape for 1x1 spatial maps).
    x_mat = jnp.transpose(x_nchw, (0, 2, 3, 1)).reshape(m, c_in)
    x_mat = jnp.pad(x_mat, ((0, m_pad - m), (0, 0)))

    out = _q_pallas(x_mat, w_fused, b_fused, tile_m)[:m]   # (M, 128) -> un-pad rows

    def to_nchw_squeeze(cols):
        o = cols.reshape(n, h, w, -1)
        o = jnp.transpose(o, (0, 3, 1, 2))   # (N, C_out, H, W)
        return jnp.squeeze(o)                # mimic torch .squeeze()

    disc_logits = to_nchw_squeeze(out[:, :d])
    mu = to_nchw_squeeze(out[:, d:d + c])
    var = jnp.exp(to_nchw_squeeze(out[:, d + c:heads]))  # exp only on real columns
    return disc_logits, mu, var


# --------------------------------------------------------------------------
# Pure-JAX reference (unfused), for correctness checking.
# --------------------------------------------------------------------------
def q_reference(x_nchw, params):
    n, c_in, h, w = x_nchw.shape
    xm = jnp.transpose(x_nchw, (0, 2, 3, 1)).reshape(-1, c_in)
    y = xm @ params["w1"] + params["b1"]

    def head(wk, bk):
        o = (y @ params[wk] + params[bk]).reshape(n, h, w, -1)
        return jnp.squeeze(jnp.transpose(o, (0, 3, 1, 2)))

    return head("wd", "bd"), head("wm", "bm"), jnp.exp(head("wv", "bv"))


if __name__ == "__main__":
    DISCRETE_VARS = 10
    CONTINUOUS_VARS = 2
    N, C_IN, H, W = 2, 1024, 1, 1   # Q head sees 1x1 spatial feature maps

    key = jax.random.PRNGKey(0)
    k_x, k_p = jax.random.split(key)
    x = jax.random.normal(k_x, (N, C_IN, H, W), jnp.float32)
    params = make_q_params(k_p, DISCRETE_VARS, CONTINUOUS_VARS, c_in=C_IN)

    disc_logits, mu, var = q_forward(
        x, params, discrete_vars=DISCRETE_VARS, continuous_vars=CONTINUOUS_VARS)
    jax.block_until_ready((disc_logits, mu, var))

    assert disc_logits.shape == (N, DISCRETE_VARS)
    assert mu.shape == (N, CONTINUOUS_VARS)
    assert var.shape == (N, CONTINUOUS_VARS)
    assert bool(jnp.all(var > 0))

    # Compare against unfused pure-JAX reference (fusion only reassociates f32).
    ref_d, ref_m, ref_v = q_reference(x, params)
    assert jnp.allclose(disc_logits, ref_d, rtol=1e-4, atol=1e-4)
    assert jnp.allclose(mu, ref_m, rtol=1e-4, atol=1e-4)
    assert jnp.allclose(var, ref_v, rtol=1e-4, atol=1e-4)

    print("KERNEL_OK")
</pallas_src>

<mosaic_0001>
module attributes {stable_mosaic.version = 11 : i64} {
  func.func @_q_fused_kernel(%arg0: i32, %arg1: memref<8x1024xf32, #tpu.memory_space<vmem>>, %arg2: memref<1024x128xf32, #tpu.memory_space<vmem>>, %arg3: memref<1x128xf32, #tpu.memory_space<vmem>>, %arg4: memref<8x128xf32, #tpu.memory_space<vmem>>) attributes {dimension_semantics = [#tpu.dimension_semantics<parallel>], iteration_bounds = array<i64: 1>, scalar_prefetch = 0 : i64, scratch_operands = 0 : i64, tpu.core_type = #tpu.core_type<tc>, window_params = [{transform_indices = @transform_0, window_bounds = array<i64: 8, 1024>}, {pipeline_mode = #tpu.pipeline_mode<synchronous>, transform_indices = @transform_1, window_bounds = array<i64: 1024, 128>}, {pipeline_mode = #tpu.pipeline_mode<synchronous>, transform_indices = @transform_2, window_bounds = array<i64: 1, 128>}, {transform_indices = @transform_3, window_bounds = array<i64: 8, 128>}]} {
    %c0 = arith.constant 0 : index
    %c0_0 = arith.constant 0 : index
    %0 = vector.load %arg1[%c0, %c0_0] : memref<8x1024xf32, #tpu.memory_space<vmem>>, vector<8x1024xf32>
    %c0_1 = arith.constant 0 : index
    %c0_2 = arith.constant 0 : index
    %1 = vector.load %arg2[%c0_1, %c0_2] : memref<1024x128xf32, #tpu.memory_space<vmem>>, vector<1024x128xf32>
    %cst = arith.constant dense<0.000000e+00> : vector<8x128xf32>
    %2 = tpu.matmul %0, %1, %cst {dimension_numbers = #tpu.dot_dimension_numbers<[1], [0], [0], [1], [0, 0, 1, 1], [], []>} : vector<8x1024xf32>, vector<1024x128xf32>, vector<8x128xf32> -> vector<8x128xf32>
    %c0_3 = arith.constant 0 : index
    %c0_4 = arith.constant 0 : index
    %3 = vector.load %arg3[%c0_3, %c0_4] : memref<1x128xf32, #tpu.memory_space<vmem>>, vector<1x128xf32>
    %4 = vector.broadcast %3 : vector<1x128xf32> to vector<8x128xf32>
    %5 = arith.addf %2, %4 : vector<8x128xf32>
    %c0_5 = arith.constant 0 : index
    %c0_6 = arith.constant 0 : index
    %6 = vector.load %arg4[%c0_5, %c0_6] : memref<8x128xf32, #tpu.memory_space<vmem>>, vector<8x128xf32>
    tpu.vector_store %arg4[%c0_5, %c0_6], %5 {strides = array<i32>} : memref<8x128xf32, #tpu.memory_space<vmem>>, vector<8x128xf32>,
    return
  }
  func.func @transform_0(%arg0: i32) -> (i32, i32) {
    %c0_i32 = arith.constant 0 : i32
    %c0_i32_0 = arith.constant 0 : i32
    return %arg0, %c0_i32 : i32, i32
  }
  func.func @transform_1(%arg0: i32) -> (i32, i32) {
    %c0_i32 = arith.constant 0 : i32
    %c0_i32_0 = arith.constant 0 : i32
    %c0_i32_1 = arith.constant 0 : i32
    return %c0_i32, %c0_i32_0 : i32, i32
  }
  func.func @transform_2(%arg0: i32) -> (i32, i32) {
    %c0_i32 = arith.constant 0 : i32
    %c0_i32_0 = arith.constant 0 : i32
    %c0_i32_1 = arith.constant 0 : i32
    return %c0_i32, %c0_i32_0 : i32, i32
  }
  func.func @transform_3(%arg0: i32) -> (i32, i32) {
    %c0_i32 = arith.constant 0 : i32
    %c0_i32_0 = arith.constant 0 : i32
    return %arg0, %c0_i32 : i32, i32
  }
}

</mosaic_0001>

<llo_original>
// kernel: q_forward.1
$region0: #{q_forward.1}
  #allocation0 [shape = 'u32[]', space=smem, size = 0x4, offset = 0x4, fixed_abs, tag = 'smem constant byte address 0x4 - core index']
  #allocation1 [shape = 'u32[144,128]{1,0:T(1,128)}', space=vmem, size = 0x12000, scoped, tag = 'internal scratch']
  %s0 = inlined_call_operand.vmem [shape: f32[8,1024], index: 0, kind: input, shape index: {}]
  %s1 = inlined_call_operand.vmem [shape: f32[1024,128], index: 1, kind: input, shape index: {}]
  %s2 = inlined_call_operand.vmem [shape: f32[1,128], index: 2, kind: input, shape index: {}]
  %s3 = inlined_call_operand.vmem [shape: f32[8,128], index: 3, kind: output, shape index: {}]
  %s4 = sld [smem:[#allocation0]]
  $region22: #{q_forward.1} parent=0
    _
  %s6 = ssub.s32 1, %s4
  %s7 = scalar_select 0, %s6, %s4
  // Predicated region
  $region2: #{q_forward.1} parent=0 // pred_check
    _
  $region3: #{q_forward.1} parent=0 // pred_check_branch
    %9 = sbr.rel (0) target = $region5
  $region4: #{q_forward.1} parent=0 // pred_region
    _
  $region5: #{q_forward.1} parent=0 // pred_fallthru
    _
  // Predicated region
  $region6: #{q_forward.1} parent=0 // pred_check
    _
  $region7: #{q_forward.1} parent=0 // pred_check_branch
    %11 = sbr.rel (0) target = $region9
  $region8: #{q_forward.1} parent=0 // pred_region
    _
  $region9: #{q_forward.1} parent=0 // pred_fallthru
    _
  // Predicated region
  $region10: #{q_forward.1} parent=0 // pred_check
    _
  $region11: #{q_forward.1} parent=0 // pred_check_branch
    %13 = sbr.rel (0) target = $region13
  $region12: #{q_forward.1} parent=0 // pred_region
    _
  $region13: #{q_forward.1} parent=0 // pred_fallthru
    _
  %v14 = vld [vmem:[%s0] sm:$0xff]
  %v15 = vld [vmem:[%s0 + $0x8] sm:$0xff]
  %v16 = vld [vmem:[%s0 + $0x10] sm:$0xff]
  %v17 = vld [vmem:[%s0 + $0x18] sm:$0xff]
  %v18 = vld [vmem:[%s0 + $0x20] sm:$0xff]
  %v19 = vld [vmem:[%s0 + $0x28] sm:$0xff]
  %v20 = vld [vmem:[%s0 + $0x30] sm:$0xff]
  %v21 = vld [vmem:[%s0 + $0x38] sm:$0xff]
  %v22 = vld [vmem:[%s1] sm:$0xff]
  %v23 = vld [vmem:[%s1 + $0x8] sm:$0xff]
  %v24 = vld [vmem:[%s1 + $0x10] sm:$0xff]
  %v25 = vld [vmem:[%s1 + $0x18] sm:$0xff]
  %v26 = vld [vmem:[%s1 + $0x20] sm:$0xff]
  %v27 = vld [vmem:[%s1 + $0x28] sm:$0xff]
  %v28 = vld [vmem:[%s1 + $0x30] sm:$0xff]
  %v29 = vld [vmem:[%s1 + $0x38] sm:$0xff]
  %v30 = vld [vmem:[%s1 + $0x40] sm:$0xff]
  %v31 = vld [vmem:[%s1 + $0x48] sm:$0xff]
  %v32 = vld [vmem:[%s1 + $0x50] sm:$0xff]
  %v33 = vld [vmem:[%s1 + $0x58] sm:$0xff]
  %v34 = vld [vmem:[%s1 + $0x60] sm:$0xff]
  %v35 = vld [vmem:[%s1 + $0x68] sm:$0xff]
  %v36 = vld [vmem:[%s1 + $0x70] sm:$0xff]
  %v37 = vld [vmem:[%s1 + $0x78] sm:$0xff]
  %v38 = vld [vmem:[%s1 + $0x80] sm:$0xff]
  %v39 = vld [vmem:[%s1 + $0x88] sm:$0xff]
  %v40 = vld [vmem:[%s1 + $0x90] sm:$0xff]
  %v41 = vld [vmem:[%s1 + $0x98] sm:$0xff]
  %v42 = vld [vmem:[%s1 + $0xa0] sm:$0xff]
  %v43 = vld [vmem:[%s1 + $0xa8] sm:$0xff]
  %v44 = vld [vmem:[%s1 + $0xb0] sm:$0xff]
  %v45 = vld [vmem:[%s1 + $0xb8] sm:$0xff]
  %v46 = vld [vmem:[%s1 + $0xc0] sm:$0xff]
  %v47 = vld [vmem:[%s1 + $0xc8] sm:$0xff]
  %v48 = vld [vmem:[%s1 + $0xd0] sm:$0xff]
  %v49 = vld [vmem:[%s1 + $0xd8] sm:$0xff]
  %v50 = vld [vmem:[%s1 + $0xe0] sm:$0xff]
  %v51 = vld [vmem:[%s1 + $0xe8] sm:$0xff]
  %v52 = vld [vmem:[%s1 + $0xf0] sm:$0xff]
  %v53 = vld [vmem:[%s1 + $0xf8] sm:$0xff]
  %v54 = vld [vmem:[%s1 + $0x100] sm:$0xff]
  %v55 = vld [vmem:[%s1 + $0x108] sm:$0xff]
  %v56 = vld [vmem:[%s1 + $0x110] sm:$0xff]
  %v57 = vld [vmem:[%s1 + $0x118] sm:$0xff]
  %v58 = vld [vmem:[%s1 + $0x120] sm:$0xff]
  %v59 = vld [vmem:[%s1 + $0x128] sm:$0xff]
  %v60 = vld [vmem:[%s1 + $0x130] sm:$0xff]
  %v61 = vld [vmem:[%s1 + $0x138] sm:$0xff]
  %v62 = vld [vmem:[%s1 + $0x140] sm:$0xff]
  %v63 = vld [vmem:[%s1 + $0x148] sm:$0xff]
  %v64 = vld [vmem:[%s1 + $0x150] sm:$0xff]
  %v65 = vld [vmem:[%s1 + $0x158] sm:$0xff]
  %v66 = vld [vmem:[%s1 + $0x160] sm:$0xff]
  %v67 = vld [vmem:[%s1 + $0x168] sm:$0xff]
  %v68 = vld [vmem:[%s1 + $0x170] sm:$0xff]
  %v69 = vld [vmem:[%s1 + $0x178] sm:$0xff]
  %v70 = vld [vmem:[%s1 + $0x180] sm:$0xff]
  %v71 = vld [vmem:[%s1 + $0x188] sm:$0xff]
  %v72 = vld [vmem:[%s1 + $0x190] sm:$0xff]
  %v73 = vld [vmem:[%s1 + $0x198] sm:$0xff]
  %v74 = vld [vmem:[%s1 + $0x1a0] sm:$0xff]
  %v75 = vld [vmem:[%s1 + $0x1a8] sm:$0xff]
  %v76 = vld [vmem:[%s1 + $0x1b0] sm:$0xff]
  %v77 = vld [vmem:[%s1 + $0x1b8] sm:$0xff]
  %v78 = vld [vmem:[%s1 + $0x1c0] sm:$0xff]
  %v79 = vld [vmem:[%s1 + $0x1c8] sm:$0xff]
  %v80 = vld [vmem:[%s1 + $0x1d0] sm:$0xff]
  %v81 = vld [vmem:[%s1 + $0x1d8] sm:$0xff]
  %v82 = vld [vmem:[%s1 + $0x1e0] sm:$0xff]
  %v83 = vld [vmem:[%s1 + $0x1e8] sm:$0xff]
  %v84 = vld [vmem:[%s1 + $0x1f0] sm:$0xff]
  %v85 = vld [vmem:[%s1 + $0x1f8] sm:$0xff]
  %v86 = vld [vmem:[%s1 + $0x200] sm:$0xff]
  %v87 = vld [vmem:[%s1 + $0x208] sm:$0xff]
  %v88 = vld [vmem:[%s1 + $0x210] sm:$0xff]
  %v89 = vld [vmem:[%s1 + $0x218] sm:$0xff]
  %v90 = vld [vmem:[%s1 + $0x220] sm:$0xff]
  %v91 = vld [vmem:[%s1 + $0x228] sm:$0xff]
  %v92 = vld [vmem:[%s1 + $0x230] sm:$0xff]
  %v93 = vld [vmem:[%s1 + $0x238] sm:$0xff]
  %v94 = vld [vmem:[%s1 + $0x240] sm:$0xff]
  %v95 = vld [vmem:[%s1 + $0x248] sm:$0xff]
  %v96 = vld [vmem:[%s1 + $0x250] sm:$0xff]
  %v97 = vld [vmem:[%s1 + $0x258] sm:$0xff]
  %v98 = vld [vmem:[%s1 + $0x260] sm:$0xff]
  %v99 = vld [vmem:[%s1 + $0x268] sm:$0xff]
  %v100 = vld [vmem:[%s1 + $0x270] sm:$0xff]
  %v101 = vld [vmem:[%s1 + $0x278] sm:$0xff]
  %v102 = vld [vmem:[%s1 + $0x280] sm:$0xff]
  %v103 = vld [vmem:[%s1 + $0x288] sm:$0xff]
  %v104 = vld [vmem:[%s1 + $0x290] sm:$0xff]
  %v105 = vld [vmem:[%s1 + $0x298] sm:$0xff]
  %v106 = vld [vmem:[%s1 + $0x2a0] sm:$0xff]
  %v107 = vld [vmem:[%s1 + $0x2a8] sm:$0xff]
  %v108 = vld [vmem:[%s1 + $0x2b0] sm:$0xff]
  %v109 = vld [vmem:[%s1 + $0x2b8] sm:$0xff]
  %v110 = vld [vmem:[%s1 + $0x2c0] sm:$0xff]
  %v111 = vld [vmem:[%s1 + $0x2c8] sm:$0xff]
  %v112 = vld [vmem:[%s1 + $0x2d0] sm:$0xff]
  %v113 = vld [vmem:[%s1 + $0x2d8] sm:$0xff]
  %v114 = vld [vmem:[%s1 + $0x2e0] sm:$0xff]
  %v115 = vld [vmem:[%s1 + $0x2e8] sm:$0xff]
  %v116 = vld [vmem:[%s1 + $0x2f0] sm:$0xff]
  %v117 = vld [vmem:[%s1 + $0x2f8] sm:$0xff]
  %v118 = vld [vmem:[%s1 + $0x300] sm:$0xff]
  %v119 = vld [vmem:[%s1 + $0x308] sm:$0xff]
  %v120 = vld [vmem:[%s1 + $0x310] sm:$0xff]
  %v121 = vld [vmem:[%s1 + $0x318] sm:$0xff]
  %v122 = vld [vmem:[%s1 + $0x320] sm:$0xff]
  %v123 = vld [vmem:[%s1 + $0x328] sm:$0xff]
  %v124 = vld [vmem:[%s1 + $0x330] sm:$0xff]
  %v125 = vld [vmem:[%s1 + $0x338] sm:$0xff]
  %v126 = vld [vmem:[%s1 + $0x340] sm:$0xff]
  %v127 = vld [vmem:[%s1 + $0x348] sm:$0xff]
  %v128 = vld [vmem:[%s1 + $0x350] sm:$0xff]
  %v129 = vld [vmem:[%s1 + $0x358] sm:$0xff]
  %v130 = vld [vmem:[%s1 + $0x360] sm:$0xff]
  %v131 = vld [vmem:[%s1 + $0x368] sm:$0xff]
  %v132 = vld [vmem:[%s1 + $0x370] sm:$0xff]
  %v133 = vld [vmem:[%s1 + $0x378] sm:$0xff]
  %v134 = vld [vmem:[%s1 + $0x380] sm:$0xff]
  %v135 = vld [vmem:[%s1 + $0x388] sm:$0xff]
  %v136 = vld [vmem:[%s1 + $0x390] sm:$0xff]
  %v137 = vld [vmem:[%s1 + $0x398] sm:$0xff]
  %v138 = vld [vmem:[%s1 + $0x3a0] sm:$0xff]
  %v139 = vld [vmem:[%s1 + $0x3a8] sm:$0xff]
  %v140 = vld [vmem:[%s1 + $0x3b0] sm:$0xff]
  %v141 = vld [vmem:[%s1 + $0x3b8] sm:$0xff]
  %v142 = vld [vmem:[%s1 + $0x3c0] sm:$0xff]
  %v143 = vld [vmem:[%s1 + $0x3c8] sm:$0xff]
  %v144 = vld [vmem:[%s1 + $0x3d0] sm:$0xff]
  %v145 = vld [vmem:[%s1 + $0x3d8] sm:$0xff]
  %v146 = vld [vmem:[%s1 + $0x3e0] sm:$0xff]
  %v147 = vld [vmem:[%s1 + $0x3e8] sm:$0xff]
  %v148 = vld [vmem:[%s1 + $0x3f0] sm:$0xff]
  %v149 = vld [vmem:[%s1 + $0x3f8] sm:$0xff]
  %v150 = vld [vmem:[%s2] sm:$0x1]
  %v152 = vlaneseq
  %v153 = vshrl.u32 %v152, 7
  %v154 = vsub.s32 0, %v153
  %v155 = vrot.slane %v150, %v154
  %157 = vmatprep.subr.mxu0 0.0
  %158 = vmatpush1.msra.mxu0 %v37
  %159 = vmatprep.subr.mxu0 0.0
  %160 = vmatpush1.msra.mxu0 %v36
  %161 = vmatprep.subr.mxu0 0.0
  %162 = vmatpush1.msra.mxu0 %v35
  %163 = vmatprep.subr.mxu0 0.0
  %164 = vmatpush1.msra.mxu0 %v34
  %165 = vmatprep.subr.mxu0 0.0
  %166 = vmatpush1.msra.mxu0 %v33
  %167 = vmatprep.subr.mxu0 0.0
  %168 = vmatpush1.msra.mxu0 %v32
  %169 = vmatprep.subr.mxu0 0.0
  %170 = vmatpush1.msra.mxu0 %v31
  %171 = vmatprep.subr.mxu0 0.0
  %172 = vmatpush1.msra.mxu0 %v30
  %173 = vmatprep.subr.mxu0 0.0
  %174 = vmatpush1.msra.mxu0 %v29
  %175 = vmatprep.subr.mxu0 0.0
  %176 = vmatpush1.msra.mxu0 %v28
  %177 = vmatprep.subr.mxu0 0.0
  %178 = vmatpush1.msra.mxu0 %v27
  %179 = vmatprep.subr.mxu0 0.0
  %180 = vmatpush1.msra.mxu0 %v26
  %181 = vmatprep.subr.mxu0 0.0
  %182 = vmatpush1.msra.mxu0 %v25
  %183 = vmatprep.subr.mxu0 0.0
  %184 = vmatpush1.msra.mxu0 %v24
  %185 = vmatprep.subr.mxu0 0.0
  %186 = vmatpush1.msra.mxu0 %v23
  %187 = vmatprep.subr.mxu0 0.0
  %188 = vmatpush1.msra.mxu0 %v22
  %189 = vmatprep.subr.mxu0 0.0
  %190 = vmatpush2.msra.mxu0 %v53
  %191 = vmatprep.subr.mxu0 0.0
  %192 = vmatpush2.msra.mxu0 %v52
  %193 = vmatprep.subr.mxu0 0.0
  %194 = vmatpush2.msra.mxu0 %v51
  %195 = vmatprep.subr.mxu0 0.0
  %196 = vmatpush2.msra.mxu0 %v50
  %197 = vmatprep.subr.mxu0 0.0
  %198 = vmatpush2.msra.mxu0 %v49
  %199 = vmatprep.subr.mxu0 0.0
  %200 = vmatpush2.msra.mxu0 %v48
  %201 = vmatprep.subr.mxu0 0.0
  %202 = vmatpush2.msra.mxu0 %v47
  %203 = vmatprep.subr.mxu0 0.0
  %204 = vmatpush2.msra.mxu0 %v46
  %205 = vmatprep.subr.mxu0 0.0
  %206 = vmatpush2.msra.mxu0 %v45
  %207 = vmatprep.subr.mxu0 0.0
  %208 = vmatpush2.msra.mxu0 %v44
  %209 = vmatprep.subr.mxu0 0.0
  %210 = vmatpush2.msra.mxu0 %v43
  %211 = vmatprep.subr.mxu0 0.0
  %212 = vmatpush2.msra.mxu0 %v42
  %213 = vmatprep.subr.mxu0 0.0
  %214 = vmatpush2.msra.mxu0 %v41
  %215 = vmatprep.subr.mxu0 0.0
  %216 = vmatpush2.msra.mxu0 %v40
  %217 = vmatprep.subr.mxu0 0.0
  %218 = vmatpush2.msra.mxu0 %v39
  %219 = vmatprep.subr.mxu0 0.0
  %220 = vmatpush2.msra.mxu0 %v38
  %221 = vmatprep.mubr.f32.mxu0 %v15
  %222 = vmatmul.mubr.f32.gmra.mxu0 %v14
  %v223 = vpop.f32.mrf.mxu0
  %v224 = vadd.f32 %v155, %v223
  %v225 = vpop.f32.mrf.mxu0
  %226 = vdwg.mxu0
  %227 = vmatprep.subr.mxu0 0.0
  %228 = vmatpush1.msra.mxu0 %v69
  %229 = vmatprep.subr.mxu0 0.0
  %230 = vmatpush1.msra.mxu0 %v68
  %231 = vmatprep.subr.mxu0 0.0
  %232 = vmatpush1.msra.mxu0 %v67
  %233 = vmatprep.subr.mxu0 0.0
  %234 = vmatpush1.msra.mxu0 %v66
  %235 = vmatprep.subr.mxu0 0.0
  %236 = vmatpush1.msra.mxu0 %v65
  %237 = vmatprep.subr.mxu0 0.0
  %238 = vmatpush1.msra.mxu0 %v64
  %239 = vmatprep.subr.mxu0 0.0
  %240 = vmatpush1.msra.mxu0 %v63
  %241 = vmatprep.subr.mxu0 0.0
  %242 = vmatpush1.msra.mxu0 %v62
  %243 = vmatprep.subr.mxu0 0.0
  %244 = vmatpush1.msra.mxu0 %v61
  %245 = vmatprep.subr.mxu0 0.0
  %246 = vmatpush1.msra.mxu0 %v60
  %247 = vmatprep.subr.mxu0 0.0
  %248 = vmatpush1.msra.mxu0 %v59
  %249 = vmatprep.subr.mxu0 0.0
  %250 = vmatpush1.msra.mxu0 %v58
  %251 = vmatprep.subr.mxu0 0.0
  %252 = vmatpush1.msra.mxu0 %v57
  %253 = vmatprep.subr.mxu0 0.0
  %254 = vmatpush1.msra.mxu0 %v56
  %255 = vmatprep.subr.mxu0 0.0
  %256 = vmatpush1.msra.mxu0 %v55
  %257 = vmatprep.subr.mxu0 0.0
  %258 = vmatpush1.msra.mxu0 %v54
  %259 = vmatprep.subr.mxu0 0.0
  %260 = vmatpush2.msra.mxu0 %v85
  %261 = vmatprep.subr.mxu0 0.0
  %262 = vmatpush2.msra.mxu0 %v84
  %263 = vmatprep.subr.mxu0 0.0
  %264 = vmatpush2.msra.mxu0 %v83
  %265 = vmatprep.subr.mxu0 0.0
  %266 = vmatpush2.msra.mxu0 %v82
  %267 = vmatprep.subr.mxu0 0.0
  %268 = vmatpush2.msra.mxu0 %v81
  %269 = vmatprep.subr.mxu0 0.0
  %270 = vmatpush2.msra.mxu0 %v80
  %271 = vmatprep.subr.mxu0 0.0
  %272 = vmatpush2.msra.mxu0 %v79
  %273 = vmatprep.subr.mxu0 0.0
  %274 = vmatpush2.msra.mxu0 %v78
  %275 = vmatprep.subr.mxu0 0.0
  %276 = vmatpush2.msra.mxu0 %v77
  %277 = vmatprep.subr.mxu0 0.0
  %278 = vmatpush2.msra.mxu0 %v76
  %279 = vmatprep.subr.mxu0 0.0
  %280 = vmatpush2.msra.mxu0 %v75
  %281 = vmatprep.subr.mxu0 0.0
  %282 = vmatpush2.msra.mxu0 %v74
  %283 = vmatprep.subr.mxu0 0.0
  %284 = vmatpush2.msra.mxu0 %v73
  %285 = vmatprep.subr.mxu0 0.0
  %286 = vmatpush2.msra.mxu0 %v72
  %287 = vmatprep.subr.mxu0 0.0
  %288 = vmatpush2.msra.mxu0 %v71
  %289 = vmatprep.subr.mxu0 0.0
  %290 = vmatpush2.msra.mxu0 %v70
  %291 = vmatprep.mubr.f32.mxu0 %v17
  %292 = vmatmul.mubr.f32.gmra.mxu0 %v16
  %v293 = vpop.f32.mrf.mxu0
  %v294 = vadd.f32 %v224, %v293
  %v295 = vpop.f32.mrf.mxu0
  %296 = vdwg.mxu0
  %297 = vmatprep.subr.mxu0 0.0
  %298 = vmatpush1.msra.mxu0 %v101
  %299 = vmatprep.subr.mxu0 0.0
  %300 = vmatpush1.msra.mxu0 %v100
  %301 = vmatprep.subr.mxu0 0.0
  %302 = vmatpush1.msra.mxu0 %v99
  %303 = vmatprep.subr.mxu0 0.0
  %304 = vmatpush1.msra.mxu0 %v98
  %305 = vmatprep.subr.mxu0 0.0
  %306 = vmatpush1.msra.mxu0 %v97
  %307 = vmatprep.subr.mxu0 0.0
  %308 = vmatpush1.msra.mxu0 %v96
  %309 = vmatprep.subr.mxu0 0.0
  %310 = vmatpush1.msra.mxu0 %v95
  %311 = vmatprep.subr.mxu0 0.0
  %312 = vmatpush1.msra.mxu0 %v94
  %313 = vmatprep.subr.mxu0 0.0
  %314 = vmatpush1.msra.mxu0 %v93
  %315 = vmatprep.subr.mxu0 0.0
  %316 = vmatpush1.msra.mxu0 %v92
  %317 = vmatprep.subr.mxu0 0.0
  %318 = vmatpush1.msra.mxu0 %v91
  %319 = vmatprep.subr.mxu0 0.0
  %320 = vmatpush1.msra.mxu0 %v90
  %321 = vmatprep.subr.mxu0 0.0
  %322 = vmatpush1.msra.mxu0 %v89
  %323 = vmatprep.subr.mxu0 0.0
  %324 = vmatpush1.msra.mxu0 %v88
  %325 = vmatprep.subr.mxu0 0.0
  %326 = vmatpush1.msra.mxu0 %v87
  %327 = vmatprep.subr.mxu0 0.0
  %328 = vmatpush1.msra.mxu0 %v86
  %329 = vmatprep.subr.mxu0 0.0
  %330 = vmatpush2.msra.mxu0 %v117
  %331 = vmatprep.subr.mxu0 0.0
  %332 = vmatpush2.msra.mxu0 %v116
  %333 = vmatprep.subr.mxu0 0.0
  %334 = vmatpush2.msra.mxu0 %v115
  %335 = vmatprep.subr.mxu0 0.0
  %336 = vmatpush2.msra.mxu0 %v114
  %337 = vmatprep.subr.mxu0 0.0
  %338 = vmatpush2.msra.mxu0 %v113
  %339 = vmatprep.subr.mxu0 0.0
  %340 = vmatpush2.msra.mxu0 %v112
  %341 = vmatprep.subr.mxu0 0.0
  %342 = vmatpush2.msra.mxu0 %v111
  %343 = vmatprep.subr.mxu0 0.0
  %344 = vmatpush2.msra.mxu0 %v110
  %345 = vmatprep.subr.mxu0 0.0
  %346 = vmatpush2.msra.mxu0 %v109
  %347 = vmatprep.subr.mxu0 0.0
  %348 = vmatpush2.msra.mxu0 %v108
  %349 = vmatprep.subr.mxu0 0.0
  %350 = vmatpush2.msra.mxu0 %v107
  %351 = vmatprep.subr.mxu0 0.0
  %352 = vmatpush2.msra.mxu0 %v106
  %353 = vmatprep.subr.mxu0 0.0
  %354 = vmatpush2.msra.mxu0 %v105
  %355 = vmatprep.subr.mxu0 0.0
  %356 = vmatpush2.msra.mxu0 %v104
  %357 = vmatprep.subr.mxu0 0.0
  %358 = vmatpush2.msra.mxu0 %v103
  %359 = vmatprep.subr.mxu0 0.0
  %360 = vmatpush2.msra.mxu0 %v102
  %361 = vmatprep.mubr.f32.mxu0 %v19
  %362 = vmatmul.mubr.f32.gmra.mxu0 %v18
  %v363 = vpop.f32.mrf.mxu0
  %v364 = vadd.f32 %v294, %v363
  %v365 = vpop.f32.mrf.mxu0
  %366 = vdwg.mxu0
  %367 = vmatprep.subr.mxu0 0.0
  %368 = vmatpush1.msra.mxu0 %v133
  %369 = vmatprep.subr.mxu0 0.0
  %370 = vmatpush1.msra.mxu0 %v132
  %371 = vmatprep.subr.mxu0 0.0
  %372 = vmatpush1.msra.mxu0 %v131
  %373 = vmatprep.subr.mxu0 0.0
  %374 = vmatpush1.msra.mxu0 %v130
  %375 = vmatprep.subr.mxu0 0.0
  %376 = vmatpush1.msra.mxu0 %v129
  %377 = vmatprep.subr.mxu0 0.0
  %378 = vmatpush1.msra.mxu0 %v128
  %379 = vmatprep.subr.mxu0 0.0
  %380 = vmatpush1.msra.mxu0 %v127
  %381 = vmatprep.subr.mxu0 0.0
  %382 = vmatpush1.msra.mxu0 %v126
  %383 = vmatprep.subr.mxu0 0.0
  %384 = vmatpush1.msra.mxu0 %v125
  %385 = vmatprep.subr.mxu0 0.0
  %386 = vmatpush1.msra.mxu0 %v124
  %387 = vmatprep.subr.mxu0 0.0
  %388 = vmatpush1.msra.mxu0 %v123
  %389 = vmatprep.subr.mxu0 0.0
  %390 = vmatpush1.msra.mxu0 %v122
  %391 = vmatprep.subr.mxu0 0.0
  %392 = vmatpush1.msra.mxu0 %v121
  %393 = vmatprep.subr.mxu0 0.0
  %394 = vmatpush1.msra.mxu0 %v120
  %395 = vmatprep.subr.mxu0 0.0
  %396 = vmatpush1.msra.mxu0 %v119
  %397 = vmatprep.subr.mxu0 0.0
  %398 = vmatpush1.msra.mxu0 %v118
  %399 = vmatprep.subr.mxu0 0.0
  %400 = vmatpush2.msra.mxu0 %v149
  %401 = vmatprep.subr.mxu0 0.0
  %402 = vmatpush2.msra.mxu0 %v148
  %403 = vmatprep.subr.mxu0 0.0
  %404 = vmatpush2.msra.mxu0 %v147
  %405 = vmatprep.subr.mxu0 0.0
  %406 = vmatpush2.msra.mxu0 %v146
  %407 = vmatprep.subr.mxu0 0.0
  %408 = vmatpush2.msra.mxu0 %v145
  %409 = vmatprep.subr.mxu0 0.0
  %410 = vmatpush2.msra.mxu0 %v144
  %411 = vmatprep.subr.mxu0 0.0
  %412 = vmatpush2.msra.mxu0 %v143
  %413 = vmatprep.subr.mxu0 0.0
  %414 = vmatpush2.msra.mxu0 %v142
  %415 = vmatprep.subr.mxu0 0.0
  %416 = vmatpush2.msra.mxu0 %v141
  %417 = vmatprep.subr.mxu0 0.0
  %418 = vmatpush2.msra.mxu0 %v140
  %419 = vmatprep.subr.mxu0 0.0
  %420 = vmatpush2.msra.mxu0 %v139
  %421 = vmatprep.subr.mxu0 0.0
  %422 = vmatpush2.msra.mxu0 %v138
  %423 = vmatprep.subr.mxu0 0.0
  %424 = vmatpush2.msra.mxu0 %v137
  %425 = vmatprep.subr.mxu0 0.0
  %426 = vmatpush2.msra.mxu0 %v136
  %427 = vmatprep.subr.mxu0 0.0
  %428 = vmatpush2.msra.mxu0 %v135
  %429 = vmatprep.subr.mxu0 0.0
  %430 = vmatpush2.msra.mxu0 %v134
  %431 = vmatprep.mubr.f32.mxu0 %v21
  %432 = vmatmul.mubr.f32.gmra.mxu0 %v20
  %v433 = vpop.f32.mrf.mxu0
  %v434 = vadd.f32 %v364, %v433
  %v435 = vpop.f32.mrf.mxu0
  %436 = vdwg.mxu0
  %437 = vst [vmem:[%s3] sm:$0xff] %v434
  // Predicated region
  $region14: #{q_forward.1} parent=0 // pred_check
    _
  $region15: #{q_forward.1} parent=0 // pred_check_branch
    %439 = sbr.rel (0) target = $region17
  $region16: #{q_forward.1} parent=0 // pred_region
    _
  $region17: #{q_forward.1} parent=0 // pred_fallthru
    _
  // Predicated region
  $region18: #{q_forward.1} parent=0 // pred_check
    _
  $region19: #{q_forward.1} parent=0 // pred_check_branch
    %441 = sbr.rel (0) target = $region21
  $region20: #{q_forward.1} parent=0 // pred_region
    _
  $region21: #{q_forward.1} parent=0 // pred_fallthru
    _

</llo_original>
